<compile_context>
chip_gen: v6e
topology: v6e:2x2x1
jax: 0.10.0
libtpu: 0.0.40
codegen_flags: <defaults>
</compile_context>

<pallas_src>
from functools import partial

import numpy as np
import jax
import jax.numpy as jnp
from jax.experimental import pallas as pl
from jax.experimental.pallas import tpu as pltpu


def _round_up(x, m):
    return ((x + m - 1) // m) * m


def _box_xyxy_kernel(ctr_ref, size_ref, scale_ref, xy1_ref, xy2_ref):
    """cxcywh -> xyxy + pixel scaling on a lane-dense [rows, boxes] layout.

    ctr_ref  : VMEM (Hp, Kp)  rows = (cx, cy) per image, lanes = selected boxes.
    size_ref : VMEM (Hp, Kp)  rows = (w, h)  per image.
    scale_ref: VMEM (Hp, 1)   f32, rows = (W, H) per image (pixel scale).
    xy1_ref  : VMEM (Hp, Kp)  rows = (x1, y1) per image, in pixels.
    xy2_ref  : VMEM (Hp, Kp)  rows = (x2, y2) per image, in pixels.

    Pure VPU: two multiply-adds + one lane-broadcast multiply, two unmasked
    full-tile stores. No XLU, no MXU, no sub-tile slicing.
    """
    ctr = ctr_ref[...].astype(jnp.float32)
    half = 0.5 * size_ref[...].astype(jnp.float32)
    s = scale_ref[...]                              # (Hp, 1) -> broadcast along lanes
    xy1_ref[...] = (ctr - half) * s
    xy2_ref[...] = (ctr + half) * s


def box_convert_scale_pallas(boxes, wh):
    """boxes [B, k, 4] cxcywh (any float dtype), wh [B, 2] f32 = (W, H).

    Returns [B, k, 4] float32 xyxy boxes in pixel coordinates.
    NOTE: assumes orig_target_sizes columns are ordered (width, height), as in
    RT-DETR; an (H, W)-ordered pipeline must swap columns at the call site.
    """
    B, k, four = boxes.shape
    assert four == 4
    rows = 2 * B                              # (cx, cy) / (w, h) rows per image
    Hp = _round_up(rows, 8)                   # sublane-dense row count
    Kp = _round_up(k, 128)                    # lane-dense -> unmasked vst

    # Layout plumbing on the small post-gather tensor only.
    bt = jnp.transpose(boxes, (0, 2, 1))                     # [B, 4, k]
    centers = bt[:, 0:2, :].reshape(rows, k)
    sizes = bt[:, 2:4, :].reshape(rows, k)
    centers = jnp.pad(centers, ((0, Hp - rows), (0, Kp - k)))
    sizes = jnp.pad(sizes, ((0, Hp - rows), (0, Kp - k)))
    scale = jnp.pad(wh.astype(jnp.float32).reshape(rows, 1),
                    ((0, Hp - rows), (0, 0)))

    xy1, xy2 = pl.pallas_call(
        _box_xyxy_kernel,
        out_shape=(jax.ShapeDtypeStruct((Hp, Kp), jnp.float32),
                   jax.ShapeDtypeStruct((Hp, Kp), jnp.float32)),
        grid=(1,),                                           # single dense block
        in_specs=[pl.BlockSpec((Hp, Kp), lambda i: (0, 0)),
                  pl.BlockSpec((Hp, Kp), lambda i: (0, 0)),
                  pl.BlockSpec((Hp, 1), lambda i: (0, 0))],
        out_specs=(pl.BlockSpec((Hp, Kp), lambda i: (0, 0)),
                   pl.BlockSpec((Hp, Kp), lambda i: (0, 0))),
        compiler_params=pltpu.CompilerParams(
            dimension_semantics=("arbitrary",)),
    )(centers, sizes, scale)

    xy1 = xy1[:rows, :k].reshape(B, 2, k)
    xy2 = xy2[:rows, :k].reshape(B, 2, k)
    xyxy = jnp.concatenate([xy1, xy2], axis=1)               # [B, 4, k]
    return jnp.transpose(xyxy, (0, 2, 1))                    # [B, k, 4]


@partial(jax.jit, static_argnames=("num_top_queries", "num_classes", "iou_thres"))
def post_process(pred_logits, pred_boxes, orig_target_sizes, *,
                 num_top_queries, num_classes, iou_thres):
    """Mirrors PostProc.forward (use_focal_loss=True path).

    Returns:
      dets [B, k, 6]  columns = (label, x1, y1, x2, y2, score)
      mask [B, k]     score > iou_thres
    """
    B, Q, C = pred_logits.shape
    assert C == num_classes
    k = num_top_queries

    # sigmoid is strictly increasing, so top-k on the raw flattened logits
    # selects exactly the same indices as top-k on sigmoid(logits); sigmoid is
    # applied only to the k selected values (no [B, Q, C] score tensor built).
    # TODO(synk): lax.top_k over Q*C dominates end-to-end time for real RT-DETR
    # shapes (Q=300, C=80); a two-stage / per-chunk partial top-k would be the
    # next end-to-end win. Kept in plain JAX (no clean Mosaic sort lowering).
    flat = pred_logits.reshape(B, Q * C)                     # C minor -> free reshape
    top_logits, idx = jax.lax.top_k(flat, k)                 # [B, k]
    top_scores = jax.nn.sigmoid(top_logits.astype(jnp.float32))
    labels = idx % num_classes
    qidx = idx // num_classes

    # Gather the k selected boxes FIRST, then convert/scale only those.
    boxes_g = jnp.take_along_axis(
        pred_boxes, jnp.broadcast_to(qidx[:, :, None], (B, k, 4)), axis=1)  # [B, k, 4]

    wh = orig_target_sizes[:, :2].astype(jnp.float32)        # (W, H) per image
    boxes_xyxy = box_convert_scale_pallas(boxes_g, wh)       # [B, k, 4] f32, pixels

    mask = top_scores > iou_thres
    dets = jnp.concatenate(
        [labels[..., None].astype(jnp.float32), boxes_xyxy, top_scores[..., None]],
        axis=-1)                                             # [B, k, 6]
    return dets, mask


if __name__ == "__main__":
    # Small synthetic shapes consistent with the module's forward:
    # pred_logits [B, Q, C], pred_boxes [B, Q, 4] (normalized cxcywh),
    # orig_target_sizes [B, 2] (width, height).
    B, Q, C = 2, 16, 8
    num_top_queries = 10          # must be <= Q * C
    iou_thres = 0.25

    key = jax.random.PRNGKey(0)
    k1, k2 = jax.random.split(key, 2)
    pred_logits = jax.random.normal(k1, (B, Q, C), dtype=jnp.float32)
    pred_boxes = jax.random.uniform(k2, (B, Q, 4), dtype=jnp.float32,
                                    minval=0.1, maxval=0.4)
    orig_target_sizes = jnp.array([[640.0, 480.0], [800.0, 600.0]], dtype=jnp.float32)

    dets, mask = post_process(pred_logits, pred_boxes, orig_target_sizes,
                              num_top_queries=num_top_queries,
                              num_classes=C, iou_thres=iou_thres)
    dets = jax.block_until_ready(dets)
    mask = jax.block_until_ready(mask)

    # Pure-JAX reference mirroring the PyTorch op order (convert + scale over
    # all Q boxes, then top-k gather) to validate the gather-first reorder.
    cx, cy, w, h = [pred_boxes[..., i] for i in range(4)]
    ref_xyxy = jnp.stack([cx - 0.5 * w, cy - 0.5 * h, cx + 0.5 * w, cy + 0.5 * h], -1)
    ref_xyxy = ref_xyxy * jnp.tile(orig_target_sizes, (1, 2))[:, None, :]
    ref_logits, ref_idx = jax.lax.top_k(pred_logits.reshape(B, Q * C), num_top_queries)
    ref_scores = jax.nn.sigmoid(ref_logits)
    ref_labels = ref_idx % C
    ref_q = ref_idx // C
    ref_boxes = jnp.take_along_axis(
        ref_xyxy, jnp.broadcast_to(ref_q[:, :, None], (B, num_top_queries, 4)), axis=1)
    ref_dets = jnp.concatenate(
        [ref_labels[..., None].astype(jnp.float32), ref_boxes, ref_scores[..., None]], -1)
    np.testing.assert_allclose(np.asarray(dets), np.asarray(ref_dets),
                               rtol=1e-5, atol=1e-4)

    # Dynamic-shape boolean masking (detections[mask]) stays host-side, like
    # the PyTorch module's `detections = detections[mask]` / return-None path.
    dets_np = np.asarray(dets)
    mask_np = np.asarray(mask)
    detections = dets_np[mask_np]                            # [N, 6]
    result = None if detections.shape[0] == 0 else detections
    # TODO(synk): remap_mscoco_category / class filtering omitted (defaults off).

    print("KERNEL_OK")
</pallas_src>

<mosaic_0001>
module attributes {stable_mosaic.version = 11 : i64} {
  func.func @_box_xyxy_kernel(%arg0: i32, %arg1: memref<8x128xf32, #tpu.memory_space<vmem>>, %arg2: memref<8x128xf32, #tpu.memory_space<vmem>>, %arg3: memref<8x1xf32, #tpu.memory_space<vmem>>, %arg4: memref<8x128xf32, #tpu.memory_space<vmem>>, %arg5: memref<8x128xf32, #tpu.memory_space<vmem>>) attributes {dimension_semantics = [#tpu.dimension_semantics<arbitrary>], iteration_bounds = array<i64: 1>, scalar_prefetch = 0 : i64, scratch_operands = 0 : i64, tpu.core_type = #tpu.core_type<tc>, window_params = [{pipeline_mode = #tpu.pipeline_mode<synchronous>, transform_indices = @transform_0, window_bounds = array<i64: 8, 128>}, {pipeline_mode = #tpu.pipeline_mode<synchronous>, transform_indices = @transform_1, window_bounds = array<i64: 8, 128>}, {pipeline_mode = #tpu.pipeline_mode<synchronous>, transform_indices = @transform_2, window_bounds = array<i64: 8, 1>}, {pipeline_mode = #tpu.pipeline_mode<synchronous>, transform_indices = @transform_3, window_bounds = array<i64: 8, 128>}, {pipeline_mode = #tpu.pipeline_mode<synchronous>, transform_indices = @transform_4, window_bounds = array<i64: 8, 128>}]} {
    %c0 = arith.constant 0 : index
    %c0_0 = arith.constant 0 : index
    %0 = vector.load %arg1[%c0, %c0_0] : memref<8x128xf32, #tpu.memory_space<vmem>>, vector<8x128xf32>
    %c0_1 = arith.constant 0 : index
    %c0_2 = arith.constant 0 : index
    %1 = vector.load %arg2[%c0_1, %c0_2] : memref<8x128xf32, #tpu.memory_space<vmem>>, vector<8x128xf32>
    %cst = arith.constant 5.000000e-01 : f32
    %2 = vector.broadcast %cst : f32 to vector<8x128xf32>
    %3 = arith.mulf %2, %1 : vector<8x128xf32>
    %c0_3 = arith.constant 0 : index
    %c0_4 = arith.constant 0 : index
    %4 = vector.load %arg3[%c0_3, %c0_4] : memref<8x1xf32, #tpu.memory_space<vmem>>, vector<8x1xf32>
    %5 = arith.subf %0, %3 : vector<8x128xf32>
    %6 = vector.broadcast %4 : vector<8x1xf32> to vector<8x128xf32>
    %7 = arith.mulf %5, %6 : vector<8x128xf32>
    %c0_5 = arith.constant 0 : index
    %c0_6 = arith.constant 0 : index
    %8 = vector.load %arg4[%c0_5, %c0_6] : memref<8x128xf32, #tpu.memory_space<vmem>>, vector<8x128xf32>
    tpu.vector_store %arg4[%c0_5, %c0_6], %7 {strides = array<i32>} : memref<8x128xf32, #tpu.memory_space<vmem>>, vector<8x128xf32>,
    %9 = arith.addf %0, %3 : vector<8x128xf32>
    %10 = vector.broadcast %4 : vector<8x1xf32> to vector<8x128xf32>
    %11 = arith.mulf %9, %10 : vector<8x128xf32>
    %c0_7 = arith.constant 0 : index
    %c0_8 = arith.constant 0 : index
    %12 = vector.load %arg5[%c0_7, %c0_8] : memref<8x128xf32, #tpu.memory_space<vmem>>, vector<8x128xf32>
    tpu.vector_store %arg5[%c0_7, %c0_8], %11 {strides = array<i32>} : memref<8x128xf32, #tpu.memory_space<vmem>>, vector<8x128xf32>,
    return
  }
  func.func @transform_0(%arg0: i32) -> (i32, i32) {
    %c0_i32 = arith.constant 0 : i32
    %c0_i32_0 = arith.constant 0 : i32
    %c0_i32_1 = arith.constant 0 : i32
    return %c0_i32, %c0_i32_0 : i32, i32
  }
  func.func @transform_1(%arg0: i32) -> (i32, i32) {
    %c0_i32 = arith.constant 0 : i32
    %c0_i32_0 = arith.constant 0 : i32
    %c0_i32_1 = arith.constant 0 : i32
    return %c0_i32, %c0_i32_0 : i32, i32
  }
  func.func @transform_2(%arg0: i32) -> (i32, i32) {
    %c0_i32 = arith.constant 0 : i32
    %c0_i32_0 = arith.constant 0 : i32
    %c0_i32_1 = arith.constant 0 : i32
    return %c0_i32, %c0_i32_0 : i32, i32
  }
  func.func @transform_3(%arg0: i32) -> (i32, i32) {
    %c0_i32 = arith.constant 0 : i32
    %c0_i32_0 = arith.constant 0 : i32
    %c0_i32_1 = arith.constant 0 : i32
    return %c0_i32, %c0_i32_0 : i32, i32
  }
  func.func @transform_4(%arg0: i32) -> (i32, i32) {
    %c0_i32 = arith.constant 0 : i32
    %c0_i32_0 = arith.constant 0 : i32
    %c0_i32_1 = arith.constant 0 : i32
    return %c0_i32, %c0_i32_0 : i32, i32
  }
}

</mosaic_0001>

<llo_original>
// kernel: post_process.1
$region0: #{post_process.1}
  #allocation0 [shape = 'u32[]', space=smem, size = 0x4, offset = 0x4, fixed_abs, tag = 'smem constant byte address 0x4 - core index']
  #allocation1 [shape = 'u32[144,128]{1,0:T(1,128)}', space=vmem, size = 0x12000, scoped, tag = 'internal scratch']
  %s0 = inlined_call_operand.vmem [shape: f32[8,128], index: 0, kind: input, shape index: {}]
  %s1 = inlined_call_operand.vmem [shape: f32[8,128], index: 1, kind: input, shape index: {}]
  %s2 = inlined_call_operand.vmem [shape: f32[8,1], index: 2, kind: input, shape index: {}]
  %s3 = inlined_call_operand.vmem [shape: f32[8,128], index: 3, kind: output, shape index: {0}]
  %s4 = inlined_call_operand.vmem [shape: f32[8,128], index: 4, kind: output, shape index: {1}]
  %5 = xla_tuple %s3, %s4
  %s6 = sld [smem:[#allocation0]]
  $region30: #{post_process.1} parent=0
    _
  %s8 = ssub.s32 1, %s6
  %s9 = scalar_select 0, %s8, %s6
  // Predicated region
  $region2: #{post_process.1} parent=0 // pred_check
    _
  $region3: #{post_process.1} parent=0 // pred_check_branch
    %11 = sbr.rel (0) target = $region5
  $region4: #{post_process.1} parent=0 // pred_region
    _
  $region5: #{post_process.1} parent=0 // pred_fallthru
    _
  // Predicated region
  $region6: #{post_process.1} parent=0 // pred_check
    _
  $region7: #{post_process.1} parent=0 // pred_check_branch
    %13 = sbr.rel (0) target = $region9
  $region8: #{post_process.1} parent=0 // pred_region
    _
  $region9: #{post_process.1} parent=0 // pred_fallthru
    _
  // Predicated region
  $region10: #{post_process.1} parent=0 // pred_check
    _
  $region11: #{post_process.1} parent=0 // pred_check_branch
    %15 = sbr.rel (0) target = $region13
  $region12: #{post_process.1} parent=0 // pred_region
    _
  $region13: #{post_process.1} parent=0 // pred_fallthru
    _
  %v16 = vld [vmem:[%s0] sm:$0xff]
  %v17 = vld [vmem:[%s1] sm:$0xff]
  %v18 = vmul.f32 %v17, 0.5
  %v19 = vld [vmem:[%s2] sm:$0xff]
  %v20 = vsub.f32 %v16, %v18
  %22 = vset.pattern.permute.xlu0 0
  %23 = vperm.xlu0 %22, %v19
  %v24 = vpop.permute.xlu0 %23
  %v26 = vmul.f32 %v20, %v24
  %27 = vst [vmem:[%s3] sm:$0xff] %v26
  %v28 = vadd.f32 %v16, %v18
  %v29 = vmul.f32 %v28, %v24
  %30 = vst [vmem:[%s4] sm:$0xff] %v29
  // Predicated region
  $region14: #{post_process.1} parent=0 // pred_check
    _
  $region15: #{post_process.1} parent=0 // pred_check_branch
    %32 = sbr.rel (0) target = $region17
  $region16: #{post_process.1} parent=0 // pred_region
    _
  $region17: #{post_process.1} parent=0 // pred_fallthru
    _
  // Predicated region
  $region18: #{post_process.1} parent=0 // pred_check
    _
  $region19: #{post_process.1} parent=0 // pred_check_branch
    %34 = sbr.rel (0) target = $region21
  $region20: #{post_process.1} parent=0 // pred_region
    _
  $region21: #{post_process.1} parent=0 // pred_fallthru
    _
  // Predicated region
  $region22: #{post_process.1} parent=0 // pred_check
    _
  $region23: #{post_process.1} parent=0 // pred_check_branch
    %36 = sbr.rel (0) target = $region25
  $region24: #{post_process.1} parent=0 // pred_region
    _
  $region25: #{post_process.1} parent=0 // pred_fallthru
    _
  // Predicated region
  $region26: #{post_process.1} parent=0 // pred_check
    _
  $region27: #{post_process.1} parent=0 // pred_check_branch
    %38 = sbr.rel (0) target = $region29
  $region28: #{post_process.1} parent=0 // pred_region
    _
  $region29: #{post_process.1} parent=0 // pred_fallthru
    _

</llo_original>
